<compile_context>
chip_gen: v7x
topology: tpu7x:2x2x1
jax: 0.10.0
libtpu: 0.0.40
codegen_flags: <defaults>
</compile_context>

<pallas_src>
import functools

import numpy as np
import jax
import jax.numpy as jnp
from jax.experimental import pallas as pl
from jax.experimental.pallas import tpu as pltpu


def _round_up(a, b):
    return (a + b - 1) // b * b


def cnn_kernel(ids_ref, tconv_ref, bconv_ref, wlin_ref, blin_ref, out_ref,
               *, batch_tile, l_pad, l_out, vocab_pad):
    # ids_ref  : (K, TN, Lp) int32  K time-shifted copies of the token ids
    # tconv_ref: (K*Vp, Fp)  bf16   fused embedding+conv taps, stacked on rows
    # bconv_ref: (1, Fp)     f32    Conv1d bias (zero beyond the real F filters)
    # wlin_ref : (1, Fp)     f32    Linear weight (zero beyond the real F filters)
    # blin_ref : (1, 1)      f32    Linear bias (SMEM scalar)
    # out_ref  : (TN, 128)   bf16   sigmoid prediction broadcast across lanes
    n_taps = ids_ref.shape[0]
    f_pad = tconv_ref.shape[1]
    rows = batch_tile * l_pad

    # One-hot gather per tap (time shift already applied wrapper-side), pieces
    # lane-concatenated at 128-aligned offsets -> (rows, K*Vp) bf16.
    v_iota = jax.lax.broadcasted_iota(jnp.int32, (batch_tile, l_pad, vocab_pad), 2)
    pieces = []
    for k in range(n_taps):                      # static, tiny unroll over taps
        ids_k = ids_ref[k]                                           # (TN, Lp) int32
        eq = ids_k[:, :, None] == v_iota                             # (TN, Lp, Vp) bool
        piece = jnp.where(eq, 1.0, 0.0).reshape(rows, vocab_pad)     # free reshape (Lp%8==0)
        pieces.append(piece.astype(jnp.bfloat16))
    onehot = jnp.concatenate(pieces, axis=1)                         # (rows, K*Vp) bf16

    # Fused embedding gather + Conv1d: ONE MXU matmul, contraction over K*Vp,
    # f32 accumulation.  conv[n*Lp+t, f] = sum_k T[k, ids[n, t+k], f].
    conv = jnp.dot(onehot, tconv_ref[...],
                   preferred_element_type=jnp.float32)               # (rows, Fp)
    conv = conv.reshape(batch_tile, l_pad, f_pad)

    # Exclude padded / wrapped time positions from the max with a tiny iota.
    t_iota = jax.lax.broadcasted_iota(jnp.int32, (1, l_pad, 1), 1)
    conv = jnp.where(t_iota < l_out, conv, -jnp.inf)

    # torch.max(conv, dim=2)[0]; bias is time-invariant so add it after the max.
    pooled = jnp.max(conv, axis=1) + bconv_ref[...]                  # (TN, Fp)

    h = jnp.maximum(pooled, 0.0)                                     # ReLU
    # Linear(F -> 1) as VPU multiply + lane reduce (padded wlin entries are zero).
    logits = jnp.sum(h * wlin_ref[...], axis=-1, keepdims=True) + blin_ref[0, 0]

    # Numerically stable sigmoid with an exact EUP reciprocal.
    z = jnp.exp(-jnp.abs(logits))
    inv = pl.reciprocal(1.0 + z)
    pred = jnp.where(logits >= 0.0, inv, z * inv)                    # (TN, 1) f32
    out_ref[...] = jnp.broadcast_to(pred, out_ref.shape).astype(out_ref.dtype)


def cnn_forward(token_ids, emb_table, w_conv, b_conv, w_lin, b_lin, kernel_size,
                batch_tile=256):
    """Replicates CNN.forward on already padded integer token ids (N, L)."""
    N, L = token_ids.shape
    V, H = emb_table.shape
    F = w_conv.shape[0]
    K = kernel_size
    Lout = L - K + 1                               # format_input guarantees L >= K

    Lp = _round_up(L, 8)                           # pad time to the sublane tile
    Fp = _round_up(F, 128)                         # pad filters to the lane tile
    Vp = _round_up(V, 128)                         # pad vocab to the lane tile

    # Batch tile: as large as the VMEM budget allows (sized for the smallest
    # VMEM chip, v7x), multiple of 16 so the bf16 output block is tile-aligned.
    bytes_per_row = Lp * (K * Vp * 6 + Fp * 4) + 2 * K * 128 * 4 + 2048
    budget = 12 * 1024 * 1024
    tn_cap = max(16, (budget // bytes_per_row) // 16 * 16)
    TN = int(min(batch_tile, tn_cap, _round_up(N, 16)))
    TN = max(16, (TN // 16) * 16)
    Np = _round_up(N, TN)

    # Token ids: pad batch/time, then build the K time-shifted copies here so
    # the kernel needs no sublane-unaligned slices or rolls at all.
    ids = jnp.pad(token_ids.astype(jnp.int32), ((0, Np - N), (0, Lp - L)))
    ids_taps = jnp.stack([jnp.roll(ids, -k, axis=1) for k in range(K)], axis=0)  # (K, Np, Lp)

    # Fuse the embedding table into the conv taps (f32 einsum, single bf16 cast):
    #   T[k, v, f] = sum_c emb[v, c] * W[f, c, k]
    T = jnp.einsum("vh,fhk->kvf", emb_table.astype(jnp.float32),
                   w_conv.astype(jnp.float32))                       # (K, V, F)
    T = jnp.pad(T, ((0, 0), (0, Vp - V), (0, Fp - F)))                # (K, Vp, Fp)
    tconv = T.reshape(K * Vp, Fp).astype(jnp.bfloat16)

    bconv = jnp.pad(b_conv.reshape(1, F), ((0, 0), (0, Fp - F))).astype(jnp.float32)
    wlin = jnp.pad(w_lin.reshape(1, F), ((0, 0), (0, Fp - F))).astype(jnp.float32)
    blin = b_lin.reshape(1, 1).astype(jnp.float32)

    kernel = functools.partial(cnn_kernel, batch_tile=TN, l_pad=Lp, l_out=Lout,
                               vocab_pad=Vp)
    out = pl.pallas_call(
        kernel,
        out_shape=jax.ShapeDtypeStruct((Np, 128), jnp.bfloat16),
        grid=(Np // TN,),
        in_specs=[
            pl.BlockSpec((K, TN, Lp), lambda i: (0, i, 0)),          # ids, batch-tiled
            pl.BlockSpec((K * Vp, Fp), lambda i: (0, 0)),            # fused table (resident)
            pl.BlockSpec((1, Fp), lambda i: (0, 0)),                 # conv bias
            pl.BlockSpec((1, Fp), lambda i: (0, 0)),                 # linear weight
            pl.BlockSpec(memory_space=pltpu.MemorySpace.SMEM),       # linear bias scalar
        ],
        out_specs=pl.BlockSpec((TN, 128), lambda i: (i, 0)),
        compiler_params=pltpu.CompilerParams(
            dimension_semantics=("parallel",),
            vmem_limit_bytes=32 * 1024 * 1024),
    )(ids_taps, tconv, bconv, wlin, blin)
    return out[:N, :1].astype(jnp.float32)


def reference_forward(token_ids, emb_table, w_conv, b_conv, w_lin, b_lin, K):
    """Pure-numpy reference mirroring the PyTorch forward (NCL conv)."""
    e = np.asarray(emb_table)[np.asarray(token_ids)]                  # (N, L, H)
    x = np.transpose(e, (0, 2, 1))                                    # (N, H, L) == NCL
    N, C, L = x.shape
    F = w_conv.shape[0]
    Lout = L - K + 1
    conv = np.zeros((N, F, Lout), np.float32)
    for t in range(Lout):
        conv[:, :, t] = np.einsum("nck,fck->nf", x[:, :, t:t + K],
                                  np.asarray(w_conv)) + np.asarray(b_conv)
    pooled = conv.max(axis=2)                                         # torch.max(dim=2)[0]
    h = np.maximum(pooled, 0.0)                                       # ReLU
    logits = h @ np.asarray(w_lin).T + np.asarray(b_lin)              # Linear(F, 1)
    return 1.0 / (1.0 + np.exp(-logits))                              # Sigmoid


if __name__ == "__main__":
    # Small, deterministic configuration implied by the module's __init__.
    vocab_size = 32
    hidden_size = 32
    kernel_size = 3
    num_filters = 16

    # Deterministic parameter init (synthetic; no checkpoint loading).
    key = jax.random.PRNGKey(0)
    k1, k2, k3, k4, k5 = jax.random.split(key, 5)
    emb_table = jax.random.normal(k1, (vocab_size, hidden_size), jnp.float32) * 0.1
    w_conv = jax.random.normal(k2, (num_filters, hidden_size, kernel_size), jnp.float32) * 0.1
    b_conv = jax.random.normal(k3, (num_filters,), jnp.float32) * 0.1
    w_lin = jax.random.normal(k4, (1, num_filters), jnp.float32) * 0.1
    b_lin = jax.random.normal(k5, (1,), jnp.float32) * 0.1

    # Replicate CNN.format_input: pad ragged token lists to max(max_len, K) with zeros.
    x_raw = [[1, 2, 3, 4, 5, 6, 7, 8],
             [9, 10, 11, 12, 13]]
    input_lengths = [len(s) for s in x_raw]
    max_len = max(max(input_lengths), kernel_size)
    token_ids_np = np.zeros((len(x_raw), max_len), dtype=np.int32)
    for i, s in enumerate(x_raw):
        token_ids_np[i, :len(s)] = np.asarray(s, dtype=np.int32)
    token_ids = jnp.asarray(token_ids_np)

    pred = cnn_forward(token_ids, emb_table, w_conv, b_conv, w_lin, b_lin, kernel_size)
    pred = jax.block_until_ready(pred)

    ref = reference_forward(token_ids_np, emb_table, w_conv, b_conv, w_lin, b_lin, kernel_size)
    # bf16 fused table + bf16 output store -> relaxed (but still tight) tolerance.
    np.testing.assert_allclose(np.asarray(pred), ref, rtol=1e-2, atol=5e-3)

    print("KERNEL_OK")
</pallas_src>

<mosaic_0001>
module attributes {stable_mosaic.version = 11 : i64} {
  func.func @cnn_kernel(%arg0: i32, %arg1: memref<3x16x8xi32, #tpu.memory_space<vmem>>, %arg2: memref<384x128xbf16, #tpu.memory_space<vmem>>, %arg3: memref<1x128xf32, #tpu.memory_space<vmem>>, %arg4: memref<1x128xf32, #tpu.memory_space<vmem>>, %arg5: memref<1x1xf32, #tpu.memory_space<smem>>, %arg6: memref<16x128xbf16, #tpu.memory_space<vmem>>) attributes {dimension_semantics = [#tpu.dimension_semantics<parallel>], iteration_bounds = array<i64: 1>, scalar_prefetch = 0 : i64, scratch_operands = 0 : i64, tpu.core_type = #tpu.core_type<tc>, window_params = [{transform_indices = @transform_0, window_bounds = array<i64: 3, 16, 8>}, {pipeline_mode = #tpu.pipeline_mode<synchronous>, transform_indices = @transform_1, window_bounds = array<i64: 384, 128>}, {pipeline_mode = #tpu.pipeline_mode<synchronous>, transform_indices = @transform_2, window_bounds = array<i64: 1, 128>}, {pipeline_mode = #tpu.pipeline_mode<synchronous>, transform_indices = @transform_3, window_bounds = array<i64: 1, 128>}, {transform_indices = @transform_4, window_bounds = array<i64: 1, 1>}, {transform_indices = @transform_5, window_bounds = array<i64: 16, 128>}]} {
    %0 = tpu.iota {dimensions = array<i32: 2>} : vector<16x8x128xi32>
    %c0 = arith.constant 0 : index
    %c0_0 = arith.constant 0 : index
    %c0_1 = arith.constant 0 : index
    %1 = vector.load %arg1[%c0, %c0_0, %c0_1] : memref<3x16x8xi32, #tpu.memory_space<vmem>>, vector<1x16x8xi32>
    %2 = vector.shape_cast %1 : vector<1x16x8xi32> to vector<16x8xi32>
    %3 = vector.shape_cast %2 : vector<16x8xi32> to vector<16x8x1xi32>
    %4 = vector.broadcast %3 : vector<16x8x1xi32> to vector<16x8x128xi32>
    %5 = arith.cmpi eq, %4, %0 : vector<16x8x128xi32>
    %cst = arith.constant 1.000000e+00 : f32
    %cst_2 = arith.constant 0.000000e+00 : f32
    %6 = vector.broadcast %cst : f32 to vector<16x8x128xf32>
    %7 = vector.broadcast %cst_2 : f32 to vector<16x8x128xf32>
    %8 = arith.select %5, %6, %7 : vector<16x8x128xi1>, vector<16x8x128xf32>
    %9 = vector.shape_cast %8 : vector<16x8x128xf32> to vector<128x128xf32>
    %10 = arith.truncf %9 : vector<128x128xf32> to vector<128x128xbf16>
    %c1 = arith.constant 1 : index
    %c0_3 = arith.constant 0 : index
    %c0_4 = arith.constant 0 : index
    %11 = vector.load %arg1[%c1, %c0_3, %c0_4] : memref<3x16x8xi32, #tpu.memory_space<vmem>>, vector<1x16x8xi32>
    %12 = vector.shape_cast %11 : vector<1x16x8xi32> to vector<16x8xi32>
    %13 = vector.shape_cast %12 : vector<16x8xi32> to vector<16x8x1xi32>
    %14 = vector.broadcast %13 : vector<16x8x1xi32> to vector<16x8x128xi32>
    %15 = arith.cmpi eq, %14, %0 : vector<16x8x128xi32>
    %cst_5 = arith.constant 1.000000e+00 : f32
    %cst_6 = arith.constant 0.000000e+00 : f32
    %16 = vector.broadcast %cst_5 : f32 to vector<16x8x128xf32>
    %17 = vector.broadcast %cst_6 : f32 to vector<16x8x128xf32>
    %18 = arith.select %15, %16, %17 : vector<16x8x128xi1>, vector<16x8x128xf32>
    %19 = vector.shape_cast %18 : vector<16x8x128xf32> to vector<128x128xf32>
    %20 = arith.truncf %19 : vector<128x128xf32> to vector<128x128xbf16>
    %c2 = arith.constant 2 : index
    %c0_7 = arith.constant 0 : index
    %c0_8 = arith.constant 0 : index
    %21 = vector.load %arg1[%c2, %c0_7, %c0_8] : memref<3x16x8xi32, #tpu.memory_space<vmem>>, vector<1x16x8xi32>
    %22 = vector.shape_cast %21 : vector<1x16x8xi32> to vector<16x8xi32>
    %23 = vector.shape_cast %22 : vector<16x8xi32> to vector<16x8x1xi32>
    %24 = vector.broadcast %23 : vector<16x8x1xi32> to vector<16x8x128xi32>
    %25 = arith.cmpi eq, %24, %0 : vector<16x8x128xi32>
    %cst_9 = arith.constant 1.000000e+00 : f32
    %cst_10 = arith.constant 0.000000e+00 : f32
    %26 = vector.broadcast %cst_9 : f32 to vector<16x8x128xf32>
    %27 = vector.broadcast %cst_10 : f32 to vector<16x8x128xf32>
    %28 = arith.select %25, %26, %27 : vector<16x8x128xi1>, vector<16x8x128xf32>
    %29 = vector.shape_cast %28 : vector<16x8x128xf32> to vector<128x128xf32>
    %30 = arith.truncf %29 : vector<128x128xf32> to vector<128x128xbf16>
    %31 = tpu.concatenate %10, %20, %30 in 1 : vector<128x128xbf16>, vector<128x128xbf16>, vector<128x128xbf16> -> vector<128x384xbf16>
    %c0_11 = arith.constant 0 : index
    %c0_12 = arith.constant 0 : index
    %32 = vector.load %arg2[%c0_11, %c0_12] : memref<384x128xbf16, #tpu.memory_space<vmem>>, vector<384x128xbf16>
    %cst_13 = arith.constant dense<0.000000e+00> : vector<128x128xf32>
    %33 = tpu.matmul %31, %32, %cst_13 {dimension_numbers = #tpu.dot_dimension_numbers<[1], [0], [0], [1], [0, 0, 1, 1], [], []>} : vector<128x384xbf16>, vector<384x128xbf16>, vector<128x128xf32> -> vector<128x128xf32>
    %34 = vector.shape_cast %33 : vector<128x128xf32> to vector<16x8x128xf32>
    %35 = tpu.iota {dimensions = array<i32: 1>} : vector<1x8x1xi32>
    %c6_i32 = arith.constant 6 : i32
    %36 = vector.broadcast %c6_i32 : i32 to vector<1x8x1xi32>
    %37 = arith.cmpi slt, %35, %36 : vector<1x8x1xi32>
    %cst_14 = arith.constant 0xFF800000 : f32
    %38 = vector.shape_cast %37 : vector<1x8x1xi1> to vector<1x8x1xi1>
    %39 = vector.broadcast %38 : vector<1x8x1xi1> to vector<16x8x128xi1>
    %40 = vector.broadcast %cst_14 : f32 to vector<16x8x128xf32>
    %41 = arith.select %39, %34, %40 : vector<16x8x128xi1>, vector<16x8x128xf32>
    %cst_15 = arith.constant dense<0xFF800000> : vector<16x128xf32>
    %42 = vector.multi_reduction <maximumf>, %41, %cst_15 [1] : vector<16x8x128xf32> to vector<16x128xf32>
    %c0_16 = arith.constant 0 : index
    %c0_17 = arith.constant 0 : index
    %43 = vector.load %arg3[%c0_16, %c0_17] : memref<1x128xf32, #tpu.memory_space<vmem>>, vector<1x128xf32>
    %44 = vector.broadcast %43 : vector<1x128xf32> to vector<16x128xf32>
    %45 = arith.addf %42, %44 : vector<16x128xf32>
    %cst_18 = arith.constant 0.000000e+00 : f32
    %46 = vector.broadcast %cst_18 : f32 to vector<16x128xf32>
    %47 = arith.maximumf %45, %46 : vector<16x128xf32>
    %c0_19 = arith.constant 0 : index
    %c0_20 = arith.constant 0 : index
    %48 = vector.load %arg4[%c0_19, %c0_20] : memref<1x128xf32, #tpu.memory_space<vmem>>, vector<1x128xf32>
    %49 = vector.broadcast %48 : vector<1x128xf32> to vector<16x128xf32>
    %50 = arith.mulf %47, %49 : vector<16x128xf32>
    %cst_21 = arith.constant dense<0.000000e+00> : vector<16xf32>
    %51 = vector.multi_reduction <add>, %50, %cst_21 [1] : vector<16x128xf32> to vector<16xf32>
    %52 = vector.shape_cast %51 : vector<16xf32> to vector<16x1xf32>
    %c0_22 = arith.constant 0 : index
    %c0_23 = arith.constant 0 : index
    %53 = memref.load %arg5[%c0_22, %c0_23] : memref<1x1xf32, #tpu.memory_space<smem>>
    %54 = vector.broadcast %53 : f32 to vector<16x1xf32>
    %55 = arith.addf %52, %54 : vector<16x1xf32>
    %56 = math.absf %55 : vector<16x1xf32>
    %cst_24 = arith.constant 0.000000e+00 : f32
    %57 = vector.broadcast %cst_24 : f32 to vector<16x1xf32>
    %58 = arith.subf %57, %56 : vector<16x1xf32>
    %59 = math.exp %58 : vector<16x1xf32>
    %cst_25 = arith.constant 1.000000e+00 : f32
    %60 = vector.broadcast %cst_25 : f32 to vector<16x1xf32>
    %61 = arith.addf %60, %59 : vector<16x1xf32>
    %62 = tpu.reciprocal %61 : vector<16x1xf32> -> vector<16x1xf32>
    %cst_26 = arith.constant 0.000000e+00 : f32
    %63 = vector.broadcast %cst_26 : f32 to vector<16x1xf32>
    %64 = arith.cmpf oge, %55, %63 : vector<16x1xf32>
    %65 = arith.mulf %59, %62 : vector<16x1xf32>
    %66 = arith.select %64, %62, %65 : vector<16x1xi1>, vector<16x1xf32>
    %67 = vector.shape_cast %66 : vector<16x1xf32> to vector<16x1xf32>
    %68 = vector.broadcast %67 : vector<16x1xf32> to vector<16x128xf32>
    %69 = arith.truncf %68 : vector<16x128xf32> to vector<16x128xbf16>
    %c0_27 = arith.constant 0 : index
    %c0_28 = arith.constant 0 : index
    %70 = vector.load %arg6[%c0_27, %c0_28] : memref<16x128xbf16, #tpu.memory_space<vmem>>, vector<16x128xbf16>
    tpu.vector_store %arg6[%c0_27, %c0_28], %69 {strides = array<i32>} : memref<16x128xbf16, #tpu.memory_space<vmem>>, vector<16x128xbf16>,
    return
  }
  func.func @transform_0(%arg0: i32) -> (i32, i32, i32) {
    %c0_i32 = arith.constant 0 : i32
    %c0_i32_0 = arith.constant 0 : i32
    %c0_i32_1 = arith.constant 0 : i32
    return %c0_i32, %arg0, %c0_i32_0 : i32, i32, i32
  }
  func.func @transform_1(%arg0: i32) -> (i32, i32) {
    %c0_i32 = arith.constant 0 : i32
    %c0_i32_0 = arith.constant 0 : i32
    %c0_i32_1 = arith.constant 0 : i32
    return %c0_i32, %c0_i32_0 : i32, i32
  }
  func.func @transform_2(%arg0: i32) -> (i32, i32) {
    %c0_i32 = arith.constant 0 : i32
    %c0_i32_0 = arith.constant 0 : i32
    %c0_i32_1 = arith.constant 0 : i32
    return %c0_i32, %c0_i32_0 : i32, i32
  }
  func.func @transform_3(%arg0: i32) -> (i32, i32) {
    %c0_i32 = arith.constant 0 : i32
    %c0_i32_0 = arith.constant 0 : i32
    %c0_i32_1 = arith.constant 0 : i32
    return %c0_i32, %c0_i32_0 : i32, i32
  }
  func.func @transform_4(%arg0: i32) -> (i32, i32) {
    %c0_i32 = arith.constant 0 : i32
    %c0_i32_0 = arith.constant 0 : i32
    %c0_i32_1 = arith.constant 0 : i32
    return %c0_i32, %c0_i32_0 : i32, i32
  }
  func.func @transform_5(%arg0: i32) -> (i32, i32) {
    %c0_i32 = arith.constant 0 : i32
    %c0_i32_0 = arith.constant 0 : i32
    return %arg0, %c0_i32 : i32, i32
  }
}

</mosaic_0001>

<llo_original>
// kernel: tpu_custom_call.1
$region0: #{tpu_custom_call.1}
  #allocation0 [shape = 'u32[]', space=smem, size = 0x4, offset = 0x4, fixed_abs, tag = 'smem constant byte address 0x4 - core index']
  #allocation1 [shape = 'u32[144,128]{1,0:T(1,128)}', space=vmem, size = 0x12000, scoped, tag = 'internal scratch']
  #allocation2 [shape = 'f32[1,1]{1,0:T(1,128)S(6)}', space=smem, size = 0x200, scoped, tag = 'scoped memory for tpu_custom_call.1']
  %s0 = inlined_call_operand.vmem [shape: s32[3,16,8], index: 0, kind: input, shape index: {}]
  %s1 = inlined_call_operand.hbm [shape: bf16[384,128], index: 1, kind: input, shape index: {}]
  %s2 = inlined_call_operand.vmem [shape: f32[1,128], index: 2, kind: input, shape index: {}]
  %s3 = inlined_call_operand.vmem [shape: f32[1,128], index: 3, kind: input, shape index: {}]
  %s4 = inlined_call_operand.<no memory space> [shape: f32[1,1], index: 4, kind: input, shape index: {}]
  %s5 = inlined_call_operand.hbm [shape: bf16[16,128], index: 5, kind: output, shape index: {}]
  %s6 = sld [smem:[#allocation0]]
  $region34: #{tpu_custom_call.1} parent=0
    _
  %s8 = ssub.s32 1, %s6
  %s9 = scalar_select 0, %s8, %s6
  %10 = sst [smem:[#allocation2]] %s4
  $region1: #{tpu_custom_call.1} parent=0
    #allocation3 [shape = 'u8[98304]{0}', space=vmem, size = 0x18000, scoped, tag = 'input window, operand 1, single buffered']
    #allocation4 [shape = 's32[1]{0}', space=sflag, size = 0x4, scoped, tag = 'scoped memory for tpu_custom_call.1']
    #allocation5 [shape = 's32[1]{0}', space=sflag, size = 0x4, scoped, tag = 'scoped memory for tpu_custom_call.1']
    #allocation6 [shape = 'u8[4096]{0}', space=vmem, size = 0x1000, scoped, tag = 'output window, operand 0, single buffered']
    %11 = vsyncpa [#allocation4], 0
    %12 = vsyncpa [#allocation5], 0
    // Predicated region
    $region2: #{tpu_custom_call.1} parent=1 // pred_check
      _
    $region3: #{tpu_custom_call.1} parent=1 // pred_check_branch
      %14 = sbr.rel (0) target = $region5
    $region4: #{tpu_custom_call.1} parent=1 // pred_region
      _
    $region5: #{tpu_custom_call.1} parent=1 // pred_fallthru
      _
    // Predicated region
    $region6: #{tpu_custom_call.1} parent=1 // pred_check
      _
    $region7: #{tpu_custom_call.1} parent=1 // pred_check_branch
      %16 = sbr.rel (0) target = $region9
    $region8: #{tpu_custom_call.1} parent=1 // pred_region
      %s18 = ssub.s32 3072, 3072
      %19 = vsyncadd [#allocation4], %s18
      %s20 = sshll.u32 [#allocation3], 4
      %s21 = int_to_ptr.vmem [resolvable:$true] %s20
      %26 = dma.hbm_to_vmem [thread:$0]  %s1, 3072, %s21, [#allocation4], 64, 64, 4
    $region9: #{tpu_custom_call.1} parent=1 // pred_fallthru
      _
    // Predicated region
    $region10: #{tpu_custom_call.1} parent=1 // pred_check
      _
    $region11: #{tpu_custom_call.1} parent=1 // pred_check_branch
      %28 = sbr.rel (0) target = $region13
    $region12: #{tpu_custom_call.1} parent=1 // pred_region
      _
    $region13: #{tpu_custom_call.1} parent=1 // pred_fallthru
      _
    // Predicated region
    $region14: #{tpu_custom_call.1} parent=1 // pred_check
      _
    $region15: #{tpu_custom_call.1} parent=1 // pred_check_branch
      %30 = sbr.rel (0) target = $region17
    $region16: #{tpu_custom_call.1} parent=1 // pred_region
      _
    $region17: #{tpu_custom_call.1} parent=1 // pred_fallthru
      _
    // Predicated region
    $region18: #{tpu_custom_call.1} parent=1 // pred_check
      _
    $region19: #{tpu_custom_call.1} parent=1 // pred_check_branch
      %32 = sbr.rel (0) target = $region21
    $region20: #{tpu_custom_call.1} parent=1 // pred_region
      _
    $region21: #{tpu_custom_call.1} parent=1 // pred_fallthru
      _
    // Predicated region
    $region22: #{tpu_custom_call.1} parent=1 // pred_check
      _
    $region23: #{tpu_custom_call.1} parent=1 // pred_check_branch
      %34 = sbr.rel (0) target = $region25
    $region24: #{tpu_custom_call.1} parent=1 // pred_region
      %35 = dma.done [#allocation4], 3072
    $region25: #{tpu_custom_call.1} parent=1 // pred_fallthru
      _
    %v37 = vlaneseq
    %v38 = vand.u32 %v37, 127
    %v39 = vld [vmem:[%s0] sm:$0xff]
    %v40 = vld [vmem:[%s0 + $0x8] sm:$0xff]
    %v41 = vlaneseq
    %v42 = vshrl.u32 %v41, 7
    %v43 = vsub.s32 0, %v42
    %v44 = vrot.slane %v39, %v43
    %46 = vbcast.lane.b32.xlu0 %v44, 256
    %v47 = vpop.permute.xlu0 %46
    %v48 = vlaneseq
    %v49 = vshrl.u32 %v48, 7
    %v50 = vsub.s32 1, %v49
    %v51 = vrot.slane %v39, %v50
    %53 = vbcast.lane.b32.xlu0 %v51, 256
    %v54 = vpop.permute.xlu0 %53
    %v55 = vlaneseq
    %v56 = vshrl.u32 %v55, 7
    %v57 = vsub.s32 2, %v56
    %v58 = vrot.slane %v39, %v57
    %60 = vbcast.lane.b32.xlu0 %v58, 256
    %v61 = vpop.permute.xlu0 %60
    %v62 = vlaneseq
    %v63 = vshrl.u32 %v62, 7
    %v64 = vsub.s32 3, %v63
    %v65 = vrot.slane %v39, %v64
    %67 = vbcast.lane.b32.xlu0 %v65, 256
    %v68 = vpop.permute.xlu0 %67
    %v69 = vlaneseq
    %v70 = vshrl.u32 %v69, 7
    %v71 = vsub.s32 4, %v70
    %v72 = vrot.slane %v39, %v71
    %74 = vbcast.lane.b32.xlu0 %v72, 256
    %v75 = vpop.permute.xlu0 %74
    %v76 = vlaneseq
    %v77 = vshrl.u32 %v76, 7
    %v78 = vsub.s32 5, %v77
    %v79 = vrot.slane %v39, %v78
    %81 = vbcast.lane.b32.xlu0 %v79, 256
    %v82 = vpop.permute.xlu0 %81
    %v83 = vlaneseq
    %v84 = vshrl.u32 %v83, 7
    %v85 = vsub.s32 6, %v84
    %v86 = vrot.slane %v39, %v85
    %88 = vbcast.lane.b32.xlu0 %v86, 256
    %v89 = vpop.permute.xlu0 %88
    %v90 = vlaneseq
    %v91 = vshrl.u32 %v90, 7
    %v92 = vsub.s32 7, %v91
    %v93 = vrot.slane %v39, %v92
    %95 = vbcast.lane.b32.xlu0 %v93, 256
    %v96 = vpop.permute.xlu0 %95
    %v97 = vlaneseq
    %v98 = vshrl.u32 %v97, 7
    %v99 = vsub.s32 0, %v98
    %v100 = vrot.slane %v40, %v99
    %102 = vbcast.lane.b32.xlu0 %v100, 256
    %v103 = vpop.permute.xlu0 %102
    %v104 = vlaneseq
    %v105 = vshrl.u32 %v104, 7
    %v106 = vsub.s32 1, %v105
    %v107 = vrot.slane %v40, %v106
    %109 = vbcast.lane.b32.xlu0 %v107, 256
    %v110 = vpop.permute.xlu0 %109
    %v111 = vlaneseq
    %v112 = vshrl.u32 %v111, 7
    %v113 = vsub.s32 2, %v112
    %v114 = vrot.slane %v40, %v113
    %116 = vbcast.lane.b32.xlu0 %v114, 256
    %v117 = vpop.permute.xlu0 %116
    %v118 = vlaneseq
    %v119 = vshrl.u32 %v118, 7
    %v120 = vsub.s32 3, %v119
    %v121 = vrot.slane %v40, %v120
    %123 = vbcast.lane.b32.xlu0 %v121, 256
    %v124 = vpop.permute.xlu0 %123
    %v125 = vlaneseq
    %v126 = vshrl.u32 %v125, 7
    %v127 = vsub.s32 4, %v126
    %v128 = vrot.slane %v40, %v127
    %130 = vbcast.lane.b32.xlu0 %v128, 256
    %v131 = vpop.permute.xlu0 %130
    %v132 = vlaneseq
    %v133 = vshrl.u32 %v132, 7
    %v134 = vsub.s32 5, %v133
    %v135 = vrot.slane %v40, %v134
    %137 = vbcast.lane.b32.xlu0 %v135, 256
    %v138 = vpop.permute.xlu0 %137
    %v139 = vlaneseq
    %v140 = vshrl.u32 %v139, 7
    %v141 = vsub.s32 6, %v140
    %v142 = vrot.slane %v40, %v141
    %144 = vbcast.lane.b32.xlu0 %v142, 256
    %v145 = vpop.permute.xlu0 %144
    %v146 = vlaneseq
    %v147 = vshrl.u32 %v146, 7
    %v148 = vsub.s32 7, %v147
    %v149 = vrot.slane %v40, %v148
    %151 = vbcast.lane.b32.xlu0 %v149, 256
    %v152 = vpop.permute.xlu0 %151
    %vm153 = vcmp.eq.s32.totalorder %v47, %v38
    %vm154 = vcmp.eq.s32.totalorder %v54, %v38
    %vm155 = vcmp.eq.s32.totalorder %v61, %v38
    %vm156 = vcmp.eq.s32.totalorder %v68, %v38
    %vm157 = vcmp.eq.s32.totalorder %v75, %v38
    %vm158 = vcmp.eq.s32.totalorder %v82, %v38
    %vm159 = vcmp.eq.s32.totalorder %v89, %v38
    %vm160 = vcmp.eq.s32.totalorder %v96, %v38
    %vm161 = vcmp.eq.s32.totalorder %v103, %v38
    %vm162 = vcmp.eq.s32.totalorder %v110, %v38
    %vm163 = vcmp.eq.s32.totalorder %v117, %v38
    %vm164 = vcmp.eq.s32.totalorder %v124, %v38
    %vm165 = vcmp.eq.s32.totalorder %v131, %v38
    %vm166 = vcmp.eq.s32.totalorder %v138, %v38
    %vm167 = vcmp.eq.s32.totalorder %v145, %v38
    %vm168 = vcmp.eq.s32.totalorder %v152, %v38
    %v169 = vsel %vm153, 1.0, 0.0
    %v170 = vsel %vm154, 1.0, 0.0
    %v171 = vsel %vm155, 1.0, 0.0
    %v172 = vsel %vm156, 1.0, 0.0
    %v173 = vsel %vm157, 1.0, 0.0
    %v174 = vsel %vm158, 1.0, 0.0
    %v175 = vsel %vm159, 1.0, 0.0
    %v176 = vsel %vm160, 1.0, 0.0
    %v177 = vsel %vm161, 1.0, 0.0
    %v178 = vsel %vm162, 1.0, 0.0
    %v179 = vsel %vm163, 1.0, 0.0
    %v180 = vsel %vm164, 1.0, 0.0
    %v181 = vsel %vm165, 1.0, 0.0
    %v182 = vsel %vm166, 1.0, 0.0
    %v183 = vsel %vm167, 1.0, 0.0
    %v184 = vsel %vm168, 1.0, 0.0
    %v185 = vpack.c.bf16 %v170, %v169
    %v186 = vpack.c.bf16 %v172, %v171
    %v187 = vpack.c.bf16 %v174, %v173
    %v188 = vpack.c.bf16 %v176, %v175
    %v189 = vpack.c.bf16 %v178, %v177
    %v190 = vpack.c.bf16 %v180, %v179
    %v191 = vpack.c.bf16 %v182, %v181
    %v192 = vpack.c.bf16 %v184, %v183
    %s193 = scalar_lea.vmem %s0, 16
    %v194 = vld [vmem:[%s193] sm:$0xff]
    %v195 = vld [vmem:[%s193 + $0x8] sm:$0xff]
    %v196 = vlaneseq
    %v197 = vshrl.u32 %v196, 7
    %v198 = vsub.s32 0, %v197
    %v199 = vrot.slane %v194, %v198
    %201 = vbcast.lane.b32.xlu0 %v199, 256
    %v202 = vpop.permute.xlu0 %201
    %v203 = vlaneseq
    %v204 = vshrl.u32 %v203, 7
    %v205 = vsub.s32 1, %v204
    %v206 = vrot.slane %v194, %v205
    %208 = vbcast.lane.b32.xlu0 %v206, 256
    %v209 = vpop.permute.xlu0 %208
    %v210 = vlaneseq
    %v211 = vshrl.u32 %v210, 7
    %v212 = vsub.s32 2, %v211
    %v213 = vrot.slane %v194, %v212
    %215 = vbcast.lane.b32.xlu0 %v213, 256
    %v216 = vpop.permute.xlu0 %215
    %v217 = vlaneseq
    %v218 = vshrl.u32 %v217, 7
    %v219 = vsub.s32 3, %v218
    %v220 = vrot.slane %v194, %v219
    %222 = vbcast.lane.b32.xlu0 %v220, 256
    %v223 = vpop.permute.xlu0 %222
    %v224 = vlaneseq
    %v225 = vshrl.u32 %v224, 7
    %v226 = vsub.s32 4, %v225
    %v227 = vrot.slane %v194, %v226
    %229 = vbcast.lane.b32.xlu0 %v227, 256
    %v230 = vpop.permute.xlu0 %229
    %v231 = vlaneseq
    %v232 = vshrl.u32 %v231, 7
    %v233 = vsub.s32 5, %v232
    %v234 = vrot.slane %v194, %v233
    %236 = vbcast.lane.b32.xlu0 %v234, 256
    %v237 = vpop.permute.xlu0 %236
    %v238 = vlaneseq
    %v239 = vshrl.u32 %v238, 7
    %v240 = vsub.s32 6, %v239
    %v241 = vrot.slane %v194, %v240
    %243 = vbcast.lane.b32.xlu0 %v241, 256
    %v244 = vpop.permute.xlu0 %243
    %v245 = vlaneseq
    %v246 = vshrl.u32 %v245, 7
    %v247 = vsub.s32 7, %v246
    %v248 = vrot.slane %v194, %v247
    %250 = vbcast.lane.b32.xlu0 %v248, 256
    %v251 = vpop.permute.xlu0 %250
    %v252 = vlaneseq
    %v253 = vshrl.u32 %v252, 7
    %v254 = vsub.s32 0, %v253
    %v255 = vrot.slane %v195, %v254
    %257 = vbcast.lane.b32.xlu0 %v255, 256
    %v258 = vpop.permute.xlu0 %257
    %v259 = vlaneseq
    %v260 = vshrl.u32 %v259, 7
    %v261 = vsub.s32 1, %v260
    %v262 = vrot.slane %v195, %v261
    %264 = vbcast.lane.b32.xlu0 %v262, 256
    %v265 = vpop.permute.xlu0 %264
    %v266 = vlaneseq
    %v267 = vshrl.u32 %v266, 7
    %v268 = vsub.s32 2, %v267
    %v269 = vrot.slane %v195, %v268
    %271 = vbcast.lane.b32.xlu0 %v269, 256
    %v272 = vpop.permute.xlu0 %271
    %v273 = vlaneseq
    %v274 = vshrl.u32 %v273, 7
    %v275 = vsub.s32 3, %v274
    %v276 = vrot.slane %v195, %v275
    %278 = vbcast.lane.b32.xlu0 %v276, 256
    %v279 = vpop.permute.xlu0 %278
    %v280 = vlaneseq
    %v281 = vshrl.u32 %v280, 7
    %v282 = vsub.s32 4, %v281
    %v283 = vrot.slane %v195, %v282
    %285 = vbcast.lane.b32.xlu0 %v283, 256
    %v286 = vpop.permute.xlu0 %285
    %v287 = vlaneseq
    %v288 = vshrl.u32 %v287, 7
    %v289 = vsub.s32 5, %v288
    %v290 = vrot.slane %v195, %v289
    %292 = vbcast.lane.b32.xlu0 %v290, 256
    %v293 = vpop.permute.xlu0 %292
    %v294 = vlaneseq
    %v295 = vshrl.u32 %v294, 7
    %v296 = vsub.s32 6, %v295
    %v297 = vrot.slane %v195, %v296
    %299 = vbcast.lane.b32.xlu0 %v297, 256
    %v300 = vpop.permute.xlu0 %299
    %v301 = vlaneseq
    %v302 = vshrl.u32 %v301, 7
    %v303 = vsub.s32 7, %v302
    %v304 = vrot.slane %v195, %v303
    %306 = vbcast.lane.b32.xlu0 %v304, 256
    %v307 = vpop.permute.xlu0 %306
    %vm308 = vcmp.eq.s32.totalorder %v202, %v38
    %vm309 = vcmp.eq.s32.totalorder %v209, %v38
    %vm310 = vcmp.eq.s32.totalorder %v216, %v38
    %vm311 = vcmp.eq.s32.totalorder %v223, %v38
    %vm312 = vcmp.eq.s32.totalorder %v230, %v38
    %vm313 = vcmp.eq.s32.totalorder %v237, %v38
    %vm314 = vcmp.eq.s32.totalorder %v244, %v38
    %vm315 = vcmp.eq.s32.totalorder %v251, %v38
    %vm316 = vcmp.eq.s32.totalorder %v258, %v38
    %vm317 = vcmp.eq.s32.totalorder %v265, %v38
    %vm318 = vcmp.eq.s32.totalorder %v272, %v38
    %vm319 = vcmp.eq.s32.totalorder %v279, %v38
    %vm320 = vcmp.eq.s32.totalorder %v286, %v38
    %vm321 = vcmp.eq.s32.totalorder %v293, %v38
    %vm322 = vcmp.eq.s32.totalorder %v300, %v38
    %vm323 = vcmp.eq.s32.totalorder %v307, %v38
    %v324 = vsel %vm308, 1.0, 0.0
    %v325 = vsel %vm309, 1.0, 0.0
    %v326 = vsel %vm310, 1.0, 0.0
    %v327 = vsel %vm311, 1.0, 0.0
    %v328 = vsel %vm312, 1.0, 0.0
    %v329 = vsel %vm313, 1.0, 0.0
    %v330 = vsel %vm314, 1.0, 0.0
    %v331 = vsel %vm315, 1.0, 0.0
    %v332 = vsel %vm316, 1.0, 0.0
    %v333 = vsel %vm317, 1.0, 0.0
    %v334 = vsel %vm318, 1.0, 0.0
    %v335 = vsel %vm319, 1.0, 0.0
    %v336 = vsel %vm320, 1.0, 0.0
    %v337 = vsel %vm321, 1.0, 0.0
    %v338 = vsel %vm322, 1.0, 0.0
    %v339 = vsel %vm323, 1.0, 0.0
    %v340 = vpack.c.bf16 %v325, %v324
    %v341 = vpack.c.bf16 %v327, %v326
    %v342 = vpack.c.bf16 %v329, %v328
    %v343 = vpack.c.bf16 %v331, %v330
    %v344 = vpack.c.bf16 %v333, %v332
    %v345 = vpack.c.bf16 %v335, %v334
    %v346 = vpack.c.bf16 %v337, %v336
    %v347 = vpack.c.bf16 %v339, %v338
    %s348 = scalar_lea.vmem %s0, 32
    %v349 = vld [vmem:[%s348] sm:$0xff]
    %v350 = vld [vmem:[%s348 + $0x8] sm:$0xff]
    %v351 = vlaneseq
    %v352 = vshrl.u32 %v351, 7
    %v353 = vsub.s32 0, %v352
    %v354 = vrot.slane %v349, %v353
    %356 = vbcast.lane.b32.xlu0 %v354, 256
    %v357 = vpop.permute.xlu0 %356
    %v358 = vlaneseq
    %v359 = vshrl.u32 %v358, 7
    %v360 = vsub.s32 1, %v359
    %v361 = vrot.slane %v349, %v360
    %363 = vbcast.lane.b32.xlu0 %v361, 256
    %v364 = vpop.permute.xlu0 %363
    %v365 = vlaneseq
    %v366 = vshrl.u32 %v365, 7
    %v367 = vsub.s32 2, %v366
    %v368 = vrot.slane %v349, %v367
    %370 = vbcast.lane.b32.xlu0 %v368, 256
    %v371 = vpop.permute.xlu0 %370
    %v372 = vlaneseq
    %v373 = vshrl.u32 %v372, 7
    %v374 = vsub.s32 3, %v373
    %v375 = vrot.slane %v349, %v374
    %377 = vbcast.lane.b32.xlu0 %v375, 256
    %v378 = vpop.permute.xlu0 %377
    %v379 = vlaneseq
    %v380 = vshrl.u32 %v379, 7
    %v381 = vsub.s32 4, %v380
    %v382 = vrot.slane %v349, %v381
    %384 = vbcast.lane.b32.xlu0 %v382, 256
    %v385 = vpop.permute.xlu0 %384
    %v386 = vlaneseq
    %v387 = vshrl.u32 %v386, 7
    %v388 = vsub.s32 5, %v387
    %v389 = vrot.slane %v349, %v388
    %391 = vbcast.lane.b32.xlu0 %v389, 256
    %v392 = vpop.permute.xlu0 %391
    %v393 = vlaneseq
    %v394 = vshrl.u32 %v393, 7
    %v395 = vsub.s32 6, %v394
    %v396 = vrot.slane %v349, %v395
    %398 = vbcast.lane.b32.xlu0 %v396, 256
    %v399 = vpop.permute.xlu0 %398
    %v400 = vlaneseq
    %v401 = vshrl.u32 %v400, 7
    %v402 = vsub.s32 7, %v401
    %v403 = vrot.slane %v349, %v402
    %405 = vbcast.lane.b32.xlu0 %v403, 256
    %v406 = vpop.permute.xlu0 %405
    %v407 = vlaneseq
    %v408 = vshrl.u32 %v407, 7
    %v409 = vsub.s32 0, %v408
    %v410 = vrot.slane %v350, %v409
    %412 = vbcast.lane.b32.xlu0 %v410, 256
    %v413 = vpop.permute.xlu0 %412
    %v414 = vlaneseq
    %v415 = vshrl.u32 %v414, 7
    %v416 = vsub.s32 1, %v415
    %v417 = vrot.slane %v350, %v416
    %419 = vbcast.lane.b32.xlu0 %v417, 256
    %v420 = vpop.permute.xlu0 %419
    %v421 = vlaneseq
    %v422 = vshrl.u32 %v421, 7
    %v423 = vsub.s32 2, %v422
    %v424 = vrot.slane %v350, %v423
    %426 = vbcast.lane.b32.xlu0 %v424, 256
    %v427 = vpop.permute.xlu0 %426
    %v428 = vlaneseq
    %v429 = vshrl.u32 %v428, 7
    %v430 = vsub.s32 3, %v429
    %v431 = vrot.slane %v350, %v430
    %433 = vbcast.lane.b32.xlu0 %v431, 256
    %v434 = vpop.permute.xlu0 %433
    %v435 = vlaneseq
    %v436 = vshrl.u32 %v435, 7
    %v437 = vsub.s32 4, %v436
    %v438 = vrot.slane %v350, %v437
    %440 = vbcast.lane.b32.xlu0 %v438, 256
    %v441 = vpop.permute.xlu0 %440
    %v442 = vlaneseq
    %v443 = vshrl.u32 %v442, 7
    %v444 = vsub.s32 5, %v443
    %v445 = vrot.slane %v350, %v444
    %447 = vbcast.lane.b32.xlu0 %v445, 256
    %v448 = vpop.permute.xlu0 %447
    %v449 = vlaneseq
    %v450 = vshrl.u32 %v449, 7
    %v451 = vsub.s32 6, %v450
    %v452 = vrot.slane %v350, %v451
    %454 = vbcast.lane.b32.xlu0 %v452, 256
    %v455 = vpop.permute.xlu0 %454
    %v456 = vlaneseq
    %v457 = vshrl.u32 %v456, 7
    %v458 = vsub.s32 7, %v457
    %v459 = vrot.slane %v350, %v458
    %461 = vbcast.lane.b32.xlu0 %v459, 256
    %v462 = vpop.permute.xlu0 %461
    %vm463 = vcmp.eq.s32.totalorder %v357, %v38
    %vm464 = vcmp.eq.s32.totalorder %v364, %v38
    %vm465 = vcmp.eq.s32.totalorder %v371, %v38
    %vm466 = vcmp.eq.s32.totalorder %v378, %v38
    %vm467 = vcmp.eq.s32.totalorder %v385, %v38
    %vm468 = vcmp.eq.s32.totalorder %v392, %v38
    %vm469 = vcmp.eq.s32.totalorder %v399, %v38
    %vm470 = vcmp.eq.s32.totalorder %v406, %v38
    %vm471 = vcmp.eq.s32.totalorder %v413, %v38
    %vm472 = vcmp.eq.s32.totalorder %v420, %v38
    %vm473 = vcmp.eq.s32.totalorder %v427, %v38
    %vm474 = vcmp.eq.s32.totalorder %v434, %v38
    %vm475 = vcmp.eq.s32.totalorder %v441, %v38
    %vm476 = vcmp.eq.s32.totalorder %v448, %v38
    %vm477 = vcmp.eq.s32.totalorder %v455, %v38
    %vm478 = vcmp.eq.s32.totalorder %v462, %v38
    %v479 = vsel %vm463, 1.0, 0.0
    %v480 = vsel %vm464, 1.0, 0.0
    %v481 = vsel %vm465, 1.0, 0.0
    %v482 = vsel %vm466, 1.0, 0.0
    %v483 = vsel %vm467, 1.0, 0.0
    %v484 = vsel %vm468, 1.0, 0.0
    %v485 = vsel %vm469, 1.0, 0.0
    %v486 = vsel %vm470, 1.0, 0.0
    %v487 = vsel %vm471, 1.0, 0.0
    %v488 = vsel %vm472, 1.0, 0.0
    %v489 = vsel %vm473, 1.0, 0.0
    %v490 = vsel %vm474, 1.0, 0.0
    %v491 = vsel %vm475, 1.0, 0.0
    %v492 = vsel %vm476, 1.0, 0.0
    %v493 = vsel %vm477, 1.0, 0.0
    %v494 = vsel %vm478, 1.0, 0.0
    %v495 = vpack.c.bf16 %v480, %v479
    %v496 = vpack.c.bf16 %v482, %v481
    %v497 = vpack.c.bf16 %v484, %v483
    %v498 = vpack.c.bf16 %v486, %v485
    %v499 = vpack.c.bf16 %v488, %v487
    %v500 = vpack.c.bf16 %v490, %v489
    %v501 = vpack.c.bf16 %v492, %v491
    %v502 = vpack.c.bf16 %v494, %v493
    %v503 = vld [vmem:[#allocation3] sm:$0xf]
    %v504 = vld [vmem:[#allocation3 + $0x4] sm:$0xf]
    %v505 = vld [vmem:[#allocation3 + $0x8] sm:$0xf]
    %v506 = vld [vmem:[#allocation3 + $0xc] sm:$0xf]
    %v507 = vld [vmem:[#allocation3 + $0x10] sm:$0xf]
    %v508 = vld [vmem:[#allocation3 + $0x14] sm:$0xf]
    %v509 = vld [vmem:[#allocation3 + $0x18] sm:$0xf]
    %v510 = vld [vmem:[#allocation3 + $0x1c] sm:$0xf]
    %v511 = vld [vmem:[#allocation3 + $0x20] sm:$0xf]
    %v512 = vld [vmem:[#allocation3 + $0x24] sm:$0xf]
    %v513 = vld [vmem:[#allocation3 + $0x28] sm:$0xf]
    %v514 = vld [vmem:[#allocation3 + $0x2c] sm:$0xf]
    %v515 = vld [vmem:[#allocation3 + $0x30] sm:$0xf]
    %v516 = vld [vmem:[#allocation3 + $0x34] sm:$0xf]
    %v517 = vld [vmem:[#allocation3 + $0x38] sm:$0xf]
    %v518 = vld [vmem:[#allocation3 + $0x3c] sm:$0xf]
    %v519 = vld [vmem:[#allocation3 + $0x40] sm:$0xf]
    %v520 = vld [vmem:[#allocation3 + $0x44] sm:$0xf]
    %v521 = vld [vmem:[#allocation3 + $0x48] sm:$0xf]
    %v522 = vld [vmem:[#allocation3 + $0x4c] sm:$0xf]
    %v523 = vld [vmem:[#allocation3 + $0x50] sm:$0xf]
    %v524 = vld [vmem:[#allocation3 + $0x54] sm:$0xf]
    %v525 = vld [vmem:[#allocation3 + $0x58] sm:$0xf]
    %v526 = vld [vmem:[#allocation3 + $0x5c] sm:$0xf]
    %v527 = vld [vmem:[#allocation3 + $0x60] sm:$0xf]
    %v528 = vld [vmem:[#allocation3 + $0x64] sm:$0xf]
    %v529 = vld [vmem:[#allocation3 + $0x68] sm:$0xf]
    %v530 = vld [vmem:[#allocation3 + $0x6c] sm:$0xf]
    %v531 = vld [vmem:[#allocation3 + $0x70] sm:$0xf]
    %v532 = vld [vmem:[#allocation3 + $0x74] sm:$0xf]
    %v533 = vld [vmem:[#allocation3 + $0x78] sm:$0xf]
    %v534 = vld [vmem:[#allocation3 + $0x7c] sm:$0xf]
    %v535 = vld [vmem:[#allocation3 + $0x80] sm:$0xf]
    %v536 = vld [vmem:[#allocation3 + $0x84] sm:$0xf]
    %v537 = vld [vmem:[#allocation3 + $0x88] sm:$0xf]
    %v538 = vld [vmem:[#allocation3 + $0x8c] sm:$0xf]
    %v539 = vld [vmem:[#allocation3 + $0x90] sm:$0xf]
    %v540 = vld [vmem:[#allocation3 + $0x94] sm:$0xf]
    %v541 = vld [vmem:[#allocation3 + $0x98] sm:$0xf]
    %v542 = vld [vmem:[#allocation3 + $0x9c] sm:$0xf]
    %v543 = vld [vmem:[#allocation3 + $0xa0] sm:$0xf]
    %v544 = vld [vmem:[#allocation3 + $0xa4] sm:$0xf]
    %v545 = vld [vmem:[#allocation3 + $0xa8] sm:$0xf]
    %v546 = vld [vmem:[#allocation3 + $0xac] sm:$0xf]
    %v547 = vld [vmem:[#allocation3 + $0xb0] sm:$0xf]
    %v548 = vld [vmem:[#allocation3 + $0xb4] sm:$0xf]
    %v549 = vld [vmem:[#allocation3 + $0xb8] sm:$0xf]
    %v550 = vld [vmem:[#allocation3 + $0xbc] sm:$0xf]
    %v599 = vunpack.c.l.b16 %v503
    %v600 = vunpack.c.l.b16 %v504
    %v601 = vunpack.c.l.b16 %v505
    %v602 = vunpack.c.l.b16 %v506
    %v603 = vunpack.c.l.b16 %v507
    %v604 = vunpack.c.l.b16 %v508
    %v605 = vunpack.c.l.b16 %v509
    %v606 = vunpack.c.l.b16 %v510
    %v607 = vunpack.c.l.b16 %v511
    %v608 = vunpack.c.l.b16 %v512
    %v609 = vunpack.c.l.b16 %v513
    %v610 = vunpack.c.l.b16 %v514
    %v611 = vunpack.c.l.b16 %v515
    %v612 = vunpack.c.l.b16 %v516
    %v613 = vunpack.c.l.b16 %v517
    %v614 = vunpack.c.l.b16 %v518
    %v615 = vunpack.c.l.b16 %v519
    %v616 = vunpack.c.l.b16 %v520
    %v617 = vunpack.c.l.b16 %v521
    %v618 = vunpack.c.l.b16 %v522
    %v619 = vunpack.c.l.b16 %v523
    %v620 = vunpack.c.l.b16 %v524
    %v621 = vunpack.c.l.b16 %v525
    %v622 = vunpack.c.l.b16 %v526
    %v623 = vunpack.c.l.b16 %v527
    %v624 = vunpack.c.l.b16 %v528
    %v625 = vunpack.c.l.b16 %v529
    %v626 = vunpack.c.l.b16 %v530
    %v627 = vunpack.c.l.b16 %v531
    %v628 = vunpack.c.l.b16 %v532
    %v629 = vunpack.c.l.b16 %v533
    %v630 = vunpack.c.l.b16 %v534
    %v631 = vunpack.c.l.b16 %v535
    %v632 = vunpack.c.l.b16 %v536
    %v633 = vunpack.c.l.b16 %v537
    %v634 = vunpack.c.l.b16 %v538
    %v635 = vunpack.c.l.b16 %v539
    %v636 = vunpack.c.l.b16 %v540
    %v637 = vunpack.c.l.b16 %v541
    %v638 = vunpack.c.l.b16 %v542
    %v639 = vunpack.c.l.b16 %v543
    %v640 = vunpack.c.l.b16 %v544
    %v641 = vunpack.c.l.b16 %v545
    %v642 = vunpack.c.l.b16 %v546
    %v643 = vunpack.c.l.b16 %v547
    %v644 = vunpack.c.l.b16 %v548
    %v645 = vunpack.c.l.b16 %v549
    %v646 = vunpack.c.l.b16 %v550
    %v647 = vpack.c.b16 %v600, %v599
    %v648 = vpack.c.b16 %v602, %v601
    %v649 = vpack.c.b16 %v604, %v603
    %v650 = vpack.c.b16 %v606, %v605
    %v651 = vpack.c.b16 %v608, %v607
    %v652 = vpack.c.b16 %v610, %v609
    %v653 = vpack.c.b16 %v612, %v611
    %v654 = vpack.c.b16 %v614, %v613
    %v655 = vpack.c.b16 %v616, %v615
    %v656 = vpack.c.b16 %v618, %v617
    %v657 = vpack.c.b16 %v620, %v619
    %v658 = vpack.c.b16 %v622, %v621
    %v659 = vpack.c.b16 %v624, %v623
    %v660 = vpack.c.b16 %v626, %v625
    %v661 = vpack.c.b16 %v628, %v627
    %v662 = vpack.c.b16 %v630, %v629
    %v663 = vpack.c.b16 %v632, %v631
    %v664 = vpack.c.b16 %v634, %v633
    %v665 = vpack.c.b16 %v636, %v635
    %v666 = vpack.c.b16 %v638, %v637
    %v667 = vpack.c.b16 %v640, %v639
    %v668 = vpack.c.b16 %v642, %v641
    %v669 = vpack.c.b16 %v644, %v643
    %v670 = vpack.c.b16 %v646, %v645
    %695 = vmatprep.subr.bf16.mxu0 0
    %696 = vmatpush1.bf16.msra.mxu0 %v647
    %697 = vmatprep.subr.bf16.mxu0 0
    %698 = vmatpush1.bf16.msra.mxu0 %v648
    %699 = vmatprep.subr.bf16.mxu0 0
    %700 = vmatpush1.bf16.msra.mxu0 %v649
    %701 = vmatprep.subr.bf16.mxu0 0
    %702 = vmatpush1.bf16.msra.mxu0 %v650
    %703 = vmatprep.subr.bf16.mxu0 0
    %704 = vmatpush1.bf16.msra.mxu0 %v651
    %705 = vmatprep.subr.bf16.mxu0 0
    %706 = vmatpush1.bf16.msra.mxu0 %v652
    %707 = vmatprep.subr.bf16.mxu0 0
    %708 = vmatpush1.bf16.msra.mxu0 %v653
    %709 = vmatprep.subr.bf16.mxu0 0
    %710 = vmatpush1.bf16.msra.mxu0 %v654
    %711 = vmatprep.subr.bf16.mxu0 0
    %712 = vmatpush1.bf16.msra.mxu0 %v655
    %713 = vmatprep.subr.bf16.mxu0 0
    %714 = vmatpush1.bf16.msra.mxu0 %v656
    %715 = vmatprep.subr.bf16.mxu0 0
    %716 = vmatpush1.bf16.msra.mxu0 %v657
    %717 = vmatprep.subr.bf16.mxu0 0
    %718 = vmatpush1.bf16.msra.mxu0 %v658
    %719 = vmatprep.subr.bf16.mxu0 0
    %720 = vmatpush1.bf16.msra.mxu0 %v659
    %721 = vmatprep.subr.bf16.mxu0 0
    %722 = vmatpush1.bf16.msra.mxu0 %v660
    %723 = vmatprep.subr.bf16.mxu0 0
    %724 = vmatpush1.bf16.msra.mxu0 %v661
    %725 = vmatprep.subr.bf16.mxu0 0
    %726 = vmatpush1.bf16.msra.mxu0 %v662
    %727 = vmatprep.mubr.bf16.mxu0 %v340
    %728 = vmatmul.mubr.bf16.gmra.mrb[0].mxu0 %v185
    %v729 = vpop.f32.mrb[0].mxu0
    %v730 = vadd.f32 0.0, %v729
    %v731 = vpop.f32.mrb[0].mxu0
    %v732 = vpop.f32.mrb[0].mxu0
    %v733 = vadd.f32 0.0, %v732
    %v734 = vpop.f32.mrb[0].mxu0
    %735 = vmatprep.mubr.bf16.mxu0 %v341
    %736 = vmatmul.mubr.bf16.gmra.mrb[0].mxu0 %v186
    %v737 = vpop.f32.mrb[0].mxu0
    %v738 = vadd.f32 0.0, %v737
    %v739 = vpop.f32.mrb[0].mxu0
    %v740 = vpop.f32.mrb[0].mxu0
    %v741 = vadd.f32 0.0, %v740
    %v742 = vpop.f32.mrb[0].mxu0
    %743 = vmatprep.mubr.bf16.mxu0 %v342
    %744 = vmatmul.mubr.bf16.gmra.mrb[0].mxu0 %v187
    %v745 = vpop.f32.mrb[0].mxu0
    %v746 = vadd.f32 0.0, %v745
    %v747 = vpop.f32.mrb[0].mxu0
    %v748 = vpop.f32.mrb[0].mxu0
    %v749 = vadd.f32 0.0, %v748
    %v750 = vpop.f32.mrb[0].mxu0
    %751 = vmatprep.mubr.bf16.mxu0 %v343
    %752 = vmatmul.mubr.bf16.gmra.mrb[0].mxu0 %v188
    %v753 = vpop.f32.mrb[0].mxu0
    %v754 = vadd.f32 0.0, %v753
    %v755 = vpop.f32.mrb[0].mxu0
    %v756 = vpop.f32.mrb[0].mxu0
    %v757 = vadd.f32 0.0, %v756
    %v758 = vpop.f32.mrb[0].mxu0
    %759 = vmatprep.mubr.bf16.mxu0 %v344
    %760 = vmatmul.mubr.bf16.gmra.mrb[0].mxu0 %v189
    %v761 = vpop.f32.mrb[0].mxu0
    %v762 = vadd.f32 0.0, %v761
    %v763 = vpop.f32.mrb[0].mxu0
    %v764 = vpop.f32.mrb[0].mxu0
    %v765 = vadd.f32 0.0, %v764
    %v766 = vpop.f32.mrb[0].mxu0
    %767 = vmatprep.mubr.bf16.mxu0 %v345
    %768 = vmatmul.mubr.bf16.gmra.mrb[0].mxu0 %v190
    %v769 = vpop.f32.mrb[0].mxu0
    %v770 = vadd.f32 0.0, %v769
    %v771 = vpop.f32.mrb[0].mxu0
    %v772 = vpop.f32.mrb[0].mxu0
    %v773 = vadd.f32 0.0, %v772
    %v774 = vpop.f32.mrb[0].mxu0
    %775 = vmatprep.mubr.bf16.mxu0 %v346
    %776 = vmatmul.mubr.bf16.gmra.mrb[0].mxu0 %v191
    %v777 = vpop.f32.mrb[0].mxu0
    %v778 = vadd.f32 0.0, %v777
    %v779 = vpop.f32.mrb[0].mxu0
    %v780 = vpop.f32.mrb[0].mxu0
    %v781 = vadd.f32 0.0, %v780
    %v782 = vpop.f32.mrb[0].mxu0
    %783 = vmatprep.mubr.bf16.mxu0 %v347
    %784 = vmatmul.mubr.bf16.gmra.mrb[0].mxu0 %v192
    %v785 = vpop.f32.mrb[0].mxu0
    %v786 = vadd.f32 0.0, %v785
    %v787 = vpop.f32.mrb[0].mxu0
    %v788 = vpop.f32.mrb[0].mxu0
    %v789 = vadd.f32 0.0, %v788
    %v790 = vpop.f32.mrb[0].mxu0
    %791 = vdwg.mxu0
    %792 = vmatprep.subr.bf16.mxu0 0
    %793 = vmatpush1.bf16.msra.mxu0 %v663
    %794 = vmatprep.subr.bf16.mxu0 0
    %795 = vmatpush1.bf16.msra.mxu0 %v664
    %796 = vmatprep.subr.bf16.mxu0 0
    %797 = vmatpush1.bf16.msra.mxu0 %v665
    %798 = vmatprep.subr.bf16.mxu0 0
    %799 = vmatpush1.bf16.msra.mxu0 %v666
    %800 = vmatprep.subr.bf16.mxu0 0
    %801 = vmatpush1.bf16.msra.mxu0 %v667
    %802 = vmatprep.subr.bf16.mxu0 0
    %803 = vmatpush1.bf16.msra.mxu0 %v668
    %804 = vmatprep.subr.bf16.mxu0 0
    %805 = vmatpush1.bf16.msra.mxu0 %v669
    %806 = vmatprep.subr.bf16.mxu0 0
    %807 = vmatpush1.bf16.msra.mxu0 %v670
    %808 = vmatprep.subr.bf16.mxu0 0
    %809 = vmatpush1.bf16.msra.mxu0 0
    %810 = vmatprep.subr.bf16.mxu0 0
    %811 = vmatpush1.bf16.msra.mxu0 0
    %812 = vmatprep.subr.bf16.mxu0 0
    %813 = vmatpush1.bf16.msra.mxu0 0
    %814 = vmatprep.subr.bf16.mxu0 0
    %815 = vmatpush1.bf16.msra.mxu0 0
    %816 = vmatprep.subr.bf16.mxu0 0
    %817 = vmatpush1.bf16.msra.mxu0 0
    %818 = vmatprep.subr.bf16.mxu0 0
    %819 = vmatpush1.bf16.msra.mxu0 0
    %820 = vmatprep.subr.bf16.mxu0 0
    %821 = vmatpush1.bf16.msra.mxu0 0
    %822 = vmatprep.subr.bf16.mxu0 0
    %823 = vmatpush1.bf16.msra.mxu0 0
    %824 = vmatprep.mubr.bf16.mxu0 0
    %825 = vmatmul.mubr.bf16.gmra.mrb[0].mxu0 %v495
    %v826 = vpop.f32.mrb[0].mxu0
    %v827 = vadd.f32 %v730, %v826
    %v828 = vpop.f32.mrb[0].mxu0
    %v829 = vpop.f32.mrb[0].mxu0
    %v830 = vadd.f32 %v733, %v829
    %v831 = vpop.f32.mrb[0].mxu0
    %832 = vmatprep.mubr.bf16.mxu0 0
    %833 = vmatmul.mubr.bf16.gmra.mrb[0].mxu0 %v496
    %v834 = vpop.f32.mrb[0].mxu0
    %v835 = vadd.f32 %v738, %v834
    %v836 = vpop.f32.mrb[0].mxu0
    %v837 = vpop.f32.mrb[0].mxu0
    %v838 = vadd.f32 %v741, %v837
    %v839 = vpop.f32.mrb[0].mxu0
    %840 = vmatprep.mubr.bf16.mxu0 0
    %841 = vmatmul.mubr.bf16.gmra.mrb[0].mxu0 %v497
    %v842 = vpop.f32.mrb[0].mxu0
    %v843 = vadd.f32 %v746, %v842
    %v844 = vpop.f32.mrb[0].mxu0
    %v845 = vpop.f32.mrb[0].mxu0
    %v846 = vadd.f32 %v749, %v845
    %v847 = vpop.f32.mrb[0].mxu0
    %848 = vmatprep.mubr.bf16.mxu0 0
    %849 = vmatmul.mubr.bf16.gmra.mrb[0].mxu0 %v498
    %v850 = vpop.f32.mrb[0].mxu0
    %v851 = vadd.f32 %v754, %v850
    %v852 = vpop.f32.mrb[0].mxu0
    %v853 = vpop.f32.mrb[0].mxu0
    %v854 = vadd.f32 %v757, %v853
    %v855 = vpop.f32.mrb[0].mxu0
    %856 = vmatprep.mubr.bf16.mxu0 0
    %857 = vmatmul.mubr.bf16.gmra.mrb[0].mxu0 %v499
    %v858 = vpop.f32.mrb[0].mxu0
    %v859 = vadd.f32 %v762, %v858
    %v860 = vpop.f32.mrb[0].mxu0
    %v861 = vpop.f32.mrb[0].mxu0
    %v862 = vadd.f32 %v765, %v861
    %v863 = vpop.f32.mrb[0].mxu0
    %864 = vmatprep.mubr.bf16.mxu0 0
    %865 = vmatmul.mubr.bf16.gmra.mrb[0].mxu0 %v500
    %v866 = vpop.f32.mrb[0].mxu0
    %v867 = vadd.f32 %v770, %v866
    %v868 = vpop.f32.mrb[0].mxu0
    %v869 = vpop.f32.mrb[0].mxu0
    %v870 = vadd.f32 %v773, %v869
    %v871 = vpop.f32.mrb[0].mxu0
    %872 = vmatprep.mubr.bf16.mxu0 0
    %873 = vmatmul.mubr.bf16.gmra.mrb[0].mxu0 %v501
    %v874 = vpop.f32.mrb[0].mxu0
    %v875 = vadd.f32 %v778, %v874
    %v876 = vpop.f32.mrb[0].mxu0
    %v877 = vpop.f32.mrb[0].mxu0
    %v878 = vadd.f32 %v781, %v877
    %v879 = vpop.f32.mrb[0].mxu0
    %880 = vmatprep.mubr.bf16.mxu0 0
    %881 = vmatmul.mubr.bf16.gmra.mrb[0].mxu0 %v502
    %v882 = vpop.f32.mrb[0].mxu0
    %v883 = vadd.f32 %v786, %v882
    %v884 = vpop.f32.mrb[0].mxu0
    %v885 = vpop.f32.mrb[0].mxu0
    %v886 = vadd.f32 %v789, %v885
    %v887 = vpop.f32.mrb[0].mxu0
    %888 = vdwg.mxu0
    %v889 = vlaneseq
    %v890 = vshrl.u32 %v889, 7
    %vm891 = vcmp.lt.s32.totalorder %v890, 6
    %v892 = vsel %vm891, 1, 0
    %vm893 = vcmp.eq.s32.totalorder %v892, 1
    %v894 = vsel %vm893, %v827, -inf
    %v895 = vsel %vm893, %v830, -inf
    %v896 = vsel %vm893, %v835, -inf
    %v897 = vsel %vm893, %v838, -inf
    %v898 = vsel %vm893, %v843, -inf
    %v899 = vsel %vm893, %v846, -inf
    %v900 = vsel %vm893, %v851, -inf
    %v901 = vsel %vm893, %v854, -inf
    %v902 = vsel %vm893, %v859, -inf
    %v903 = vsel %vm893, %v862, -inf
    %v904 = vsel %vm893, %v867, -inf
    %v905 = vsel %vm893, %v870, -inf
    %v906 = vsel %vm893, %v875, -inf
    %v907 = vsel %vm893, %v878, -inf
    %v908 = vsel %vm893, %v883, -inf
    %v909 = vsel %vm893, %v886, -inf
    %v910 = vrot.slane %v894, 4
    %v911 = vmax.f32 %v894, %v910
    %v912 = vrot.slane %v911, 2
    %v913 = vmax.f32 %v911, %v912
    %v914 = vrot.slane %v913, 1
    %v915 = vmax.f32 %v913, %v914
    %v916 = vrot.slane %v895, 4
    %v917 = vmax.f32 %v895, %v916
    %v918 = vrot.slane %v917, 2
    %v919 = vmax.f32 %v917, %v918
    %v920 = vrot.slane %v919, 1
    %v921 = vmax.f32 %v919, %v920
    %v922 = vrot.slane %v896, 4
    %v923 = vmax.f32 %v896, %v922
    %v924 = vrot.slane %v923, 2
    %v925 = vmax.f32 %v923, %v924
    %v926 = vrot.slane %v925, 1
    %v927 = vmax.f32 %v925, %v926
    %v928 = vrot.slane %v897, 4
    %v929 = vmax.f32 %v897, %v928
    %v930 = vrot.slane %v929, 2
    %v931 = vmax.f32 %v929, %v930
    %v932 = vrot.slane %v931, 1
    %v933 = vmax.f32 %v931, %v932
    %v934 = vrot.slane %v898, 4
    %v935 = vmax.f32 %v898, %v934
    %v936 = vrot.slane %v935, 2
    %v937 = vmax.f32 %v935, %v936
    %v938 = vrot.slane %v937, 1
    %v939 = vmax.f32 %v937, %v938
    %v940 = vrot.slane %v899, 4
    %v941 = vmax.f32 %v899, %v940
    %v942 = vrot.slane %v941, 2
    %v943 = vmax.f32 %v941, %v942
    %v944 = vrot.slane %v943, 1
    %v945 = vmax.f32 %v943, %v944
    %v946 = vrot.slane %v900, 4
    %v947 = vmax.f32 %v900, %v946
    %v948 = vrot.slane %v947, 2
    %v949 = vmax.f32 %v947, %v948
    %v950 = vrot.slane %v949, 1
    %v951 = vmax.f32 %v949, %v950
    %v952 = vrot.slane %v901, 4
    %v953 = vmax.f32 %v901, %v952
    %v954 = vrot.slane %v953, 2
    %v955 = vmax.f32 %v953, %v954
    %v956 = vrot.slane %v955, 1
    %v957 = vmax.f32 %v955, %v956
    %v958 = vrot.slane %v902, 4
    %v959 = vmax.f32 %v902, %v958
    %v960 = vrot.slane %v959, 2
    %v961 = vmax.f32 %v959, %v960
    %v962 = vrot.slane %v961, 1
    %v963 = vmax.f32 %v961, %v962
    %v964 = vrot.slane %v903, 4
    %v965 = vmax.f32 %v903, %v964
    %v966 = vrot.slane %v965, 2
    %v967 = vmax.f32 %v965, %v966
    %v968 = vrot.slane %v967, 1
    %v969 = vmax.f32 %v967, %v968
    %v970 = vrot.slane %v904, 4
    %v971 = vmax.f32 %v904, %v970
    %v972 = vrot.slane %v971, 2
    %v973 = vmax.f32 %v971, %v972
    %v974 = vrot.slane %v973, 1
    %v975 = vmax.f32 %v973, %v974
    %v976 = vrot.slane %v905, 4
    %v977 = vmax.f32 %v905, %v976
    %v978 = vrot.slane %v977, 2
    %v979 = vmax.f32 %v977, %v978
    %v980 = vrot.slane %v979, 1
    %v981 = vmax.f32 %v979, %v980
    %v982 = vrot.slane %v906, 4
    %v983 = vmax.f32 %v906, %v982
    %v984 = vrot.slane %v983, 2
    %v985 = vmax.f32 %v983, %v984
    %v986 = vrot.slane %v985, 1
    %v987 = vmax.f32 %v985, %v986
    %v988 = vrot.slane %v907, 4
    %v989 = vmax.f32 %v907, %v988
    %v990 = vrot.slane %v989, 2
    %v991 = vmax.f32 %v989, %v990
    %v992 = vrot.slane %v991, 1
    %v993 = vmax.f32 %v991, %v992
    %v994 = vrot.slane %v908, 4
    %v995 = vmax.f32 %v908, %v994
    %v996 = vrot.slane %v995, 2
    %v997 = vmax.f32 %v995, %v996
    %v998 = vrot.slane %v997, 1
    %v999 = vmax.f32 %v997, %v998
    %v1000 = vrot.slane %v909, 4
    %v1001 = vmax.f32 %v909, %v1000
    %v1002 = vrot.slane %v1001, 2
    %v1003 = vmax.f32 %v1001, %v1002
    %v1004 = vrot.slane %v1003, 1
    %v1005 = vmax.f32 %v1003, %v1004
    %v1006 = vld [vmem:[%s2] sm:$0x1]
    %v1008 = vlaneseq
    %v1009 = vshrl.u32 %v1008, 7
    %v1010 = vsub.s32 0, %v1009
    %v1011 = vrot.slane %v1006, %v1010
    %v1013 = vadd.f32 %v915, %v1011
    %v1014 = vadd.f32 %v921, %v1011
    %v1015 = vadd.f32 %v927, %v1011
    %v1016 = vadd.f32 %v933, %v1011
    %v1017 = vadd.f32 %v939, %v1011
    %v1018 = vadd.f32 %v945, %v1011
    %v1019 = vadd.f32 %v951, %v1011
    %v1020 = vadd.f32 %v957, %v1011
    %v1021 = vadd.f32 %v963, %v1011
    %v1022 = vadd.f32 %v969, %v1011
    %v1023 = vadd.f32 %v975, %v1011
    %v1024 = vadd.f32 %v981, %v1011
    %v1025 = vadd.f32 %v987, %v1011
    %v1026 = vadd.f32 %v993, %v1011
    %v1027 = vadd.f32 %v999, %v1011
    %v1028 = vadd.f32 %v1005, %v1011
    %v1029 = vmax.f32 %v1013, 0.0
    %v1030 = vmax.f32 %v1014, 0.0
    %v1031 = vmax.f32 %v1015, 0.0
    %v1032 = vmax.f32 %v1016, 0.0
    %v1033 = vmax.f32 %v1017, 0.0
    %v1034 = vmax.f32 %v1018, 0.0
    %v1035 = vmax.f32 %v1019, 0.0
    %v1036 = vmax.f32 %v1020, 0.0
    %v1037 = vmax.f32 %v1021, 0.0
    %v1038 = vmax.f32 %v1022, 0.0
    %v1039 = vmax.f32 %v1023, 0.0
    %v1040 = vmax.f32 %v1024, 0.0
    %v1041 = vmax.f32 %v1025, 0.0
    %v1042 = vmax.f32 %v1026, 0.0
    %v1043 = vmax.f32 %v1027, 0.0
    %v1044 = vmax.f32 %v1028, 0.0
    %v1045 = vld [vmem:[%s3] sm:$0x1]
    %v1047 = vlaneseq
    %v1048 = vshrl.u32 %v1047, 7
    %v1049 = vsub.s32 0, %v1048
    %v1050 = vrot.slane %v1045, %v1049
    %v1052 = vmul.f32 %v1029, %v1050
    %v1053 = vmul.f32 %v1030, %v1050
    %v1054 = vmul.f32 %v1031, %v1050
    %v1055 = vmul.f32 %v1032, %v1050
    %v1056 = vmul.f32 %v1033, %v1050
    %v1057 = vmul.f32 %v1034, %v1050
    %v1058 = vmul.f32 %v1035, %v1050
    %v1059 = vmul.f32 %v1036, %v1050
    %v1060 = vmul.f32 %v1037, %v1050
    %v1061 = vmul.f32 %v1038, %v1050
    %v1062 = vmul.f32 %v1039, %v1050
    %v1063 = vmul.f32 %v1040, %v1050
    %v1064 = vmul.f32 %v1041, %v1050
    %v1065 = vmul.f32 %v1042, %v1050
    %v1066 = vmul.f32 %v1043, %v1050
    %v1067 = vmul.f32 %v1044, %v1050
    %v1084 = vrot.slane %v1053, 7
    %vm1085 = vcmask 1041409
    %v1086 = vsel %vm1085, %v1084, %v1052
    %v1087 = vrot.slane %v1054, 6
    %vm1088 = vcmask 1042434
    %v1089 = vsel %vm1088, %v1087, %v1086
    %v1090 = vrot.slane %v1055, 5
    %vm1091 = vcmask 1043459
    %v1092 = vsel %vm1091, %v1090, %v1089
    %v1093 = vrot.slane %v1056, 4
    %vm1094 = vcmask 1044484
    %v1095 = vsel %vm1094, %v1093, %v1092
    %v1096 = vrot.slane %v1057, 3
    %vm1097 = vcmask 1045509
    %v1098 = vsel %vm1097, %v1096, %v1095
    %v1099 = vrot.slane %v1058, 2
    %vm1100 = vcmask 1046534
    %v1101 = vsel %vm1100, %v1099, %v1098
    %v1102 = vrot.slane %v1059, 1
    %vm1103 = vcmask 1047559
    %v1104 = vsel %vm1103, %v1102, %v1101
    %v1105 = vrot.slane %v1061, 7
    %v1106 = vsel %vm1085, %v1105, %v1060
    %v1107 = vrot.slane %v1062, 6
    %v1108 = vsel %vm1088, %v1107, %v1106
    %v1109 = vrot.slane %v1063, 5
    %v1110 = vsel %vm1091, %v1109, %v1108
    %v1111 = vrot.slane %v1064, 4
    %v1112 = vsel %vm1094, %v1111, %v1110
    %v1113 = vrot.slane %v1065, 3
    %v1114 = vsel %vm1097, %v1113, %v1112
    %v1115 = vrot.slane %v1066, 2
    %v1116 = vsel %vm1100, %v1115, %v1114
    %v1117 = vrot.slane %v1067, 1
    %v1118 = vsel %vm1103, %v1117, %v1116
    %1121 = vadd.xlane.f32.xlu0 %v1104
    %v1122 = vpop.xlane.xlu0 %1121
    %1123 = vadd.xlane.f32.xlu0 %v1118
    %v1124 = vpop.xlane.xlu0 %1123
    %s1125 = sld [smem:[#allocation2]]
    %v1126 = vstv %s1125
    %v1127 = vadd.f32 %v1122, %v1126
    %v1128 = vadd.f32 %v1124, %v1126
    %v1129 = vand.u32 2147483647, %v1127
    %v1130 = vand.u32 2147483647, %v1128
    %v1131 = vsub.f32 0.0, %v1129
    %v1132 = vsub.f32 0.0, %v1130
    %v1133 = vmul.f32 %v1131, 1.442695
    %v1134 = vpow.pop %v1133
    %v1135 = vmul.f32 %v1132, 1.442695
    %v1136 = vpow.pop %v1135
    %v1137 = vadd.f32 %v1134, 1.0
    %v1138 = vadd.f32 %v1136, 1.0
    %v1139 = vrcp.pop %v1137
    %v1140 = vrcp.pop %v1138
    %vm1141 = vcmp.ge.f32.partialorder %v1127, 0.0
    %vm1142 = vcmp.ge.f32.partialorder %v1128, 0.0
    %v1143 = vmul.f32 %v1134, %v1139
    %v1144 = vmul.f32 %v1136, %v1140
    %v1145 = vsel %vm1141, %v1139, %v1143
    %v1146 = vsel %vm1142, %v1140, %v1144
    %v1147 = vpack.c.bf16 %v1146, %v1145
    %v1150 = vunpack.c.l.s4 839922192
    %v1151 = vunpack.c.0.s8 %v1150
    %v1152 = vlaneseq
    %v1153 = vshrl.u32 %v1152, 7
    %v1154 = vsub.s32 %v1151, %v1153
    %v1155 = vrot.slane %v1147, %v1154
    %v1157 = vunpack.c.l.s4 1985246804
    %v1158 = vunpack.c.0.s8 %v1157
    %v1159 = vlaneseq
    %v1160 = vshrl.u32 %v1159, 7
    %v1161 = vsub.s32 %v1158, %v1160
    %v1162 = vrot.slane %v1147, %v1161
    %1165 = vst [vmem:[#allocation6] sm:$0xf] %v1155
    %1166 = vst [vmem:[#allocation6 + $0x4] sm:$0xf] %v1162
    // Predicated region
    $region26: #{tpu_custom_call.1} parent=1 // pred_check
      _
    $region27: #{tpu_custom_call.1} parent=1 // pred_check_branch
      %1168 = sbr.rel (0) target = $region29
    $region28: #{tpu_custom_call.1} parent=1 // pred_region
      %s1170 = ssub.s32 128, 128
      %1171 = vsyncadd [#allocation5], %s1170
      %s1172 = sshll.u32 [#allocation6], 4
      %s1173 = int_to_ptr.vmem [resolvable:$true] %s1172
      %1178 = dma.vmem_to_hbm [thread:$0]  %s1173, 128, %s5, [#allocation5], 64, 64, 4
    $region29: #{tpu_custom_call.1} parent=1 // pred_fallthru
      _
    // Predicated region
    $region30: #{tpu_custom_call.1} parent=1 // pred_check
      _
    $region31: #{tpu_custom_call.1} parent=1 // pred_check_branch
      %1180 = sbr.rel (0) target = $region33
    $region32: #{tpu_custom_call.1} parent=1 // pred_region
      %1181 = dma.done [#allocation5], 128
    $region33: #{tpu_custom_call.1} parent=1 // pred_fallthru
      _
    %1182 = vsyncpa [#allocation4], 1
    %1183 = vsyncpa [#allocation5], 1

</llo_original>
